<compile_context>
chip_gen: v7x
topology: tpu7x:2x2x1
jax: 0.10.0
libtpu: 0.0.40
codegen_flags: <defaults>
</compile_context>

<pallas_src>
import jax
import jax.numpy as jnp
from jax import lax
from jax.experimental import pallas as pl
from jax.experimental.pallas import tpu as pltpu


_NEG_BIG = -1e30


def _make_kernel(seq_len, seq_pad, tc, n_col, has_mask):
    """Kernel body specialized on (S, padded S, column tile, #tiles, mask?)."""
    inv_s = 1.0 / float(seq_len)
    padded = seq_pad != seq_len

    def kernel(*refs):
        refs = list(refs)
        x_ref = refs.pop(0)                                    # (bt, Sp, D)
        m_ref = refs.pop(0) if has_mask else None              # (bt, Sp)
        out_ref = refs.pop(0)                                  # (bt, D)
        wacc_ref = refs.pop(0) if n_col > 1 else None          # (bt, Sp) f32

        c = pl.program_id(1)

        x = x_ref[...]                                         # source dtype

        # Column tile sliced from the resident block (single HBM stream).
        if n_col > 1:
            col0 = pl.multiple_of(c * tc, tc)
            xc = x_ref[:, pl.ds(col0, tc), :]                  # (bt, tc, D)
            mc = m_ref[:, pl.ds(col0, tc)] if has_mask else None
        else:
            xc = x
            mc = m_ref[...] if has_mask else None

        if has_mask:
            xc = xc * mc[:, :, None]                           # mask the tile only

        # a[b, s, t] = <x[b, s, :], xc[b, t, :]>   (MXU, f32 accumulation,
        # no explicit transpose, no masked copy of the full x block).
        a = lax.dot_general(
            x, xc,
            dimension_numbers=(((2,), (2,)), ((0,), (0,))),
            preferred_element_type=jnp.float32,
        )                                                      # (bt, Sp, tc)

        if has_mask:
            # Row mask on the scores: a == (m*x) @ (m*x)^T exactly.
            a = a * m_ref[...].astype(jnp.float32)[:, :, None]

        if padded:
            # Pad rows must not enter any column's softmax.
            row_idx = lax.broadcasted_iota(jnp.int32, (seq_pad, 1), 0)
            a = a + jnp.where(row_idx < seq_len, 0.0, _NEG_BIG)[None, :, :]

        # torch.softmax(attn, dim=1): softmax over s; columns are independent,
        # so a per-column-tile softmax is exact.
        a = a - jnp.max(a, axis=1, keepdims=True)
        e = jnp.exp(a)
        recip = 1.0 / jnp.sum(e, axis=1, keepdims=True)        # exact, (bt,1,tc)

        if padded:
            # Pad columns (only present in the last tile) must not contribute
            # to the row sums of the softmax.
            col_idx = c * tc + lax.broadcasted_iota(jnp.int32, (1, tc), 1)
            recip = recip * (col_idx < seq_len).astype(jnp.float32)[None]

        # Row sums of the normalized softmax over this column tile.
        w_part = jnp.sum(e * recip, axis=2)                    # (bt, Sp) f32

        def _finalize(wacc):
            w = wacc * inv_s                                   # w = mean_t(norm)
            if has_mask:
                w = w * m_ref[...].astype(jnp.float32)         # fold row mask
            # out[b, d] = sum_s w[b, s] * x[b, s, d]  (MXU; no f32 copy of x).
            w3 = w.astype(x.dtype)[:, None, :]                 # (bt, 1, Sp)
            out = lax.dot_general(
                w3, x,
                dimension_numbers=(((2,), (1,)), ((0,), (0,))),
                preferred_element_type=jnp.float32,
            )                                                  # (bt, 1, D)
            out_ref[...] = out[:, 0, :].astype(out_ref.dtype)

        if n_col > 1:
            @pl.when(c == 0)
            def _():
                wacc_ref[...] = jnp.zeros_like(wacc_ref)

            wacc_ref[...] += w_part

            @pl.when(c == n_col - 1)
            def _():
                _finalize(wacc_ref[...])
        else:
            _finalize(w_part)

    return kernel


def _plan(batch, seq_len, dim, itemsize):
    """Pick (bt, b_pad, S_pad, tc, n_col) against a VMEM budget that is safe
    on v5e / v6e / v7x (~44 MiB live per grid step)."""
    sublane = max(8, 32 // itemsize)            # f32: 8, bf16: 16, int8: 32
    if batch <= sublane:
        bt, b_pad = batch, batch                # single full-batch block
    else:
        bt = sublane
        b_pad = -(-batch // sublane) * sublane

    if seq_len <= 256:
        return bt, b_pad, seq_len, seq_len, 1

    s_pad = -(-seq_len // 128) * 128
    budget = 44 * 2 ** 20
    tc = 128
    for cand in (512, 256):
        if s_pad % cand:
            continue
        live = (2 * bt * s_pad * dim * itemsize      # double-buffered x block
                + 3 * bt * s_pad * cand * 4          # f32 score/exp temporaries
                + bt * s_pad * (4 + 2 * itemsize)    # w accumulator + mask
                + 4 * bt * dim * itemsize)           # output block
        if live <= budget:
            tc = cand
            break
    # TODO(synk): if even tc=128 blows the budget (huge S*D), the row axis
    # would need tiling too (online-softmax carry); not implemented here.
    return bt, b_pad, s_pad, tc, s_pad // tc


def attn_sum_3d(x, mask=None):
    """Pallas implementation of AttnSum3d.forward (TRAINABLE=False).

    x    : (B, S, D) float array
    mask : optional (B, S); multiplied into x (broadcast over D)
    Returns (out, attn_mean) with shapes (B, 1, D) and (B, S).
    """
    B, S, D = x.shape
    dtype = x.dtype
    itemsize = jnp.dtype(dtype).itemsize
    has_mask = mask is not None

    bt, b_pad, s_pad, tc, n_col = _plan(B, S, D, itemsize)

    xp = x
    if b_pad != B or s_pad != S:
        xp = jnp.pad(x, ((0, b_pad - B), (0, s_pad - S), (0, 0)))
    mp = None
    if has_mask:
        mp = mask.astype(dtype)
        if b_pad != B or s_pad != S:
            mp = jnp.pad(mp, ((0, b_pad - B), (0, s_pad - S)))

    kernel = _make_kernel(S, s_pad, tc, n_col, has_mask)

    in_specs = [pl.BlockSpec((bt, s_pad, D), lambda b, c: (b, 0, 0))]
    args = [xp]
    if has_mask:
        in_specs.append(pl.BlockSpec((bt, s_pad), lambda b, c: (b, 0)))
        args.append(mp)

    scratch_shapes = (
        [pltpu.VMEM((bt, s_pad), jnp.float32)] if n_col > 1 else []
    )

    bytes_accessed = xp.size * itemsize + b_pad * D * itemsize
    if has_mask:
        bytes_accessed += mp.size * itemsize
    cost = pl.CostEstimate(
        flops=int(2 * B * S * S * D + 2 * B * S * D),
        transcendentals=int(B * S * S),
        bytes_accessed=int(bytes_accessed),
    )

    out = pl.pallas_call(
        kernel,
        out_shape=jax.ShapeDtypeStruct((b_pad, D), dtype),   # lane-dense (B, D)
        grid=(b_pad // bt, n_col),
        in_specs=in_specs,
        out_specs=pl.BlockSpec((bt, D), lambda b, c: (b, 0)),
        scratch_shapes=scratch_shapes,
        compiler_params=pltpu.CompilerParams(
            dimension_semantics=("parallel", "arbitrary"),
            # Above the default scoped limits (16/32 MiB), below v7x's 64 MiB
            # physical VMEM; tiles were budgeted to ~44 MiB above.
            vmem_limit_bytes=56 * 2 ** 20,
        ),
        cost_estimate=cost,
    )(*args)

    if b_pad != B:
        out = out[:B]

    # softmax over dim=1 followed by mean over dim=1 is identically 1/S:
    # emit the exact constant instead of an XLU reduction per column tile.
    attn_mean = jnp.full((B, S), 1.0 / S, dtype=dtype)
    # Restore the PyTorch output shape (B, 1, D); the reshape is free in XLA.
    return out[:, None, :], attn_mean


def _reference(x, mask=None):
    # Pure-JAX mirror of the PyTorch forward (TRAINABLE=False).
    if mask is not None:
        x = x * mask[:, :, None]
    a = jnp.einsum("bsd,btd->bst", x, x)                  # bmm(x, x^T)
    norm = jax.nn.softmax(a, axis=1)                      # softmax over dim=1
    out = jnp.einsum("bst,bsd->btd", norm, x).mean(axis=1, keepdims=True)
    return out, jnp.mean(norm, axis=1)


def _check(x, mask, atol=1e-4, rtol=1e-4):
    out, aw = attn_sum_3d(x, mask)
    out = jax.block_until_ready(out)
    aw = jax.block_until_ready(aw)
    ref_out, ref_aw = _reference(x, mask)
    assert out.shape == ref_out.shape and aw.shape == ref_aw.shape
    assert jnp.allclose(out, ref_out, atol=atol, rtol=rtol), (
        float(jnp.max(jnp.abs(out - ref_out))))
    assert jnp.allclose(aw, ref_aw, atol=atol, rtol=rtol)


if __name__ == "__main__":
    key = jax.random.PRNGKey(0)
    kx, km, kx2, km2 = jax.random.split(key, 4)

    # Small shapes matching the module's expected (batch, seq, hidden) input.
    B, S, D = 2, 8, 32
    x = jax.random.normal(kx, (B, S, D), dtype=jnp.float32)
    mask = (jax.random.uniform(km, (B, S)) > 0.25).astype(jnp.float32)

    _check(x, mask)      # masked path
    _check(x, None)      # mask=None specialization (no mask stream at all)

    # Exercise the multi-column-tile + padded-S path (S not a multiple of 128).
    B2, S2, D2 = 2, 300, 64
    x2 = 0.1 * jax.random.normal(kx2, (B2, S2, D2), dtype=jnp.float32)
    mask2 = (jax.random.uniform(km2, (B2, S2)) > 0.25).astype(jnp.float32)
    _check(x2, mask2)
    _check(x2, None)

    print("KERNEL_OK")
</pallas_src>

<mosaic_0001>
module attributes {stable_mosaic.version = 11 : i64} {
  func.func @kernel(%arg0: i32, %arg1: i32, %arg2: memref<2x8x32xf32, #tpu.memory_space<vmem>>, %arg3: memref<2x8xf32, #tpu.memory_space<vmem>>, %arg4: memref<2x32xf32, #tpu.memory_space<vmem>>) attributes {dimension_semantics = [#tpu.dimension_semantics<parallel>, #tpu.dimension_semantics<arbitrary>], iteration_bounds = array<i64: 1, 1>, scalar_prefetch = 0 : i64, scratch_operands = 0 : i64, tpu.core_type = #tpu.core_type<tc>, window_params = [{transform_indices = @transform_0, window_bounds = array<i64: 2, 8, 32>}, {transform_indices = @transform_1, window_bounds = array<i64: 2, 8>}, {transform_indices = @transform_2, window_bounds = array<i64: 2, 32>}]} {
    %c0 = arith.constant 0 : index
    %c0_0 = arith.constant 0 : index
    %c0_1 = arith.constant 0 : index
    %0 = vector.load %arg2[%c0, %c0_0, %c0_1] : memref<2x8x32xf32, #tpu.memory_space<vmem>>, vector<2x8x32xf32>
    %c0_2 = arith.constant 0 : index
    %c0_3 = arith.constant 0 : index
    %1 = vector.load %arg3[%c0_2, %c0_3] : memref<2x8xf32, #tpu.memory_space<vmem>>, vector<2x8xf32>
    %2 = vector.shape_cast %1 : vector<2x8xf32> to vector<2x8x1xf32>
    %3 = vector.broadcast %2 : vector<2x8x1xf32> to vector<2x8x32xf32>
    %4 = arith.mulf %0, %3 : vector<2x8x32xf32>
    %cst = arith.constant dense<0.000000e+00> : vector<2x8x8xf32>
    %5 = tpu.matmul %0, %4, %cst {dimension_numbers = #tpu.dot_dimension_numbers<[2], [2], [1], [1], [0, 0, 0, 1, 1, 1], [0], [0]>} : vector<2x8x32xf32>, vector<2x8x32xf32>, vector<2x8x8xf32> -> vector<2x8x8xf32>
    %c0_4 = arith.constant 0 : index
    %c0_5 = arith.constant 0 : index
    %6 = vector.load %arg3[%c0_4, %c0_5] : memref<2x8xf32, #tpu.memory_space<vmem>>, vector<2x8xf32>
    %7 = vector.shape_cast %6 : vector<2x8xf32> to vector<2x8x1xf32>
    %8 = vector.broadcast %7 : vector<2x8x1xf32> to vector<2x8x8xf32>
    %9 = arith.mulf %5, %8 : vector<2x8x8xf32>
    %cst_6 = arith.constant dense<0xFF800000> : vector<2x8xf32>
    %10 = vector.multi_reduction <maximumf>, %9, %cst_6 [1] : vector<2x8x8xf32> to vector<2x8xf32>
    %11 = vector.shape_cast %10 : vector<2x8xf32> to vector<2x1x8xf32>
    %12 = vector.broadcast %11 : vector<2x1x8xf32> to vector<2x8x8xf32>
    %13 = arith.subf %9, %12 : vector<2x8x8xf32>
    %14 = math.exp %13 : vector<2x8x8xf32>
    %cst_7 = arith.constant dense<0.000000e+00> : vector<2x8xf32>
    %15 = vector.multi_reduction <add>, %14, %cst_7 [1] : vector<2x8x8xf32> to vector<2x8xf32>
    %16 = vector.shape_cast %15 : vector<2x8xf32> to vector<2x1x8xf32>
    %cst_8 = arith.constant 1.000000e+00 : f32
    %17 = vector.broadcast %cst_8 : f32 to vector<2x1x8xf32>
    %18 = arith.divf %17, %16 : vector<2x1x8xf32>
    %19 = vector.broadcast %18 : vector<2x1x8xf32> to vector<2x8x8xf32>
    %20 = arith.mulf %14, %19 : vector<2x8x8xf32>
    %cst_9 = arith.constant dense<0.000000e+00> : vector<2x8xf32>
    %21 = vector.multi_reduction <add>, %20, %cst_9 [2] : vector<2x8x8xf32> to vector<2x8xf32>
    %cst_10 = arith.constant 1.250000e-01 : f32
    %22 = vector.broadcast %cst_10 : f32 to vector<2x8xf32>
    %23 = arith.mulf %21, %22 : vector<2x8xf32>
    %c0_11 = arith.constant 0 : index
    %c0_12 = arith.constant 0 : index
    %24 = vector.load %arg3[%c0_11, %c0_12] : memref<2x8xf32, #tpu.memory_space<vmem>>, vector<2x8xf32>
    %25 = arith.mulf %23, %24 : vector<2x8xf32>
    %26 = vector.shape_cast %25 : vector<2x8xf32> to vector<2x1x8xf32>
    %cst_13 = arith.constant dense<0.000000e+00> : vector<2x1x32xf32>
    %27 = tpu.matmul %26, %0, %cst_13 {dimension_numbers = #tpu.dot_dimension_numbers<[2], [1], [1], [2], [0, 0, 0, 1, 1, 2], [0], [0]>} : vector<2x1x8xf32>, vector<2x8x32xf32>, vector<2x1x32xf32> -> vector<2x1x32xf32>
    %28 = vector.shape_cast %27 : vector<2x1x32xf32> to vector<2x32xf32>
    %c0_14 = arith.constant 0 : index
    %c0_15 = arith.constant 0 : index
    %29 = vector.load %arg4[%c0_14, %c0_15] : memref<2x32xf32, #tpu.memory_space<vmem>>, vector<2x32xf32>
    tpu.vector_store %arg4[%c0_14, %c0_15], %28 {strides = array<i32>} : memref<2x32xf32, #tpu.memory_space<vmem>>, vector<2x32xf32>,
    return
  }
  func.func @transform_0(%arg0: i32, %arg1: i32) -> (i32, i32, i32) {
    %c0_i32 = arith.constant 0 : i32
    %c0_i32_0 = arith.constant 0 : i32
    %c0_i32_1 = arith.constant 0 : i32
    return %arg0, %c0_i32, %c0_i32_0 : i32, i32, i32
  }
  func.func @transform_1(%arg0: i32, %arg1: i32) -> (i32, i32) {
    %c0_i32 = arith.constant 0 : i32
    %c0_i32_0 = arith.constant 0 : i32
    return %arg0, %c0_i32 : i32, i32
  }
  func.func @transform_2(%arg0: i32, %arg1: i32) -> (i32, i32) {
    %c0_i32 = arith.constant 0 : i32
    %c0_i32_0 = arith.constant 0 : i32
    return %arg0, %c0_i32 : i32, i32
  }
}

</mosaic_0001>

<llo_original>
// kernel: tpu_custom_call.1
$region0: #{tpu_custom_call.1}
  #allocation0 [shape = 'u32[]', space=smem, size = 0x4, offset = 0x4, fixed_abs, tag = 'smem constant byte address 0x4 - core index']
  #allocation1 [shape = 'u32[144,128]{1,0:T(1,128)}', space=vmem, size = 0x12000, scoped, tag = 'internal scratch']
  %s0 = inlined_call_operand.hbm [shape: f32[2,8,32], index: 0, kind: input, shape index: {}]
  %s1 = inlined_call_operand.vmem [shape: f32[2,8], index: 1, kind: input, shape index: {}]
  %s2 = inlined_call_operand.hbm [shape: f32[2,32], index: 2, kind: output, shape index: {}]
  %s3 = sld [smem:[#allocation0]]
  $region22: #{tpu_custom_call.1} parent=0
    _
  %s5 = ssub.s32 1, %s3
  %s6 = scalar_select 0, %s5, %s3
  $region1: #{tpu_custom_call.1} parent=0
    #allocation2 [shape = 'u8[8192]{0}', space=vmem, size = 0x2000, scoped, tag = 'input window, operand 0, single buffered']
    #allocation3 [shape = 's32[1]{0}', space=sflag, size = 0x4, scoped, tag = 'scoped memory for tpu_custom_call.1']
    #allocation4 [shape = 's32[1]{0}', space=sflag, size = 0x4, scoped, tag = 'scoped memory for tpu_custom_call.1']
    #allocation5 [shape = 'u8[1024]{0}', space=vmem, size = 0x400, scoped, tag = 'output window, operand 0, single buffered']
    %7 = vsyncpa [#allocation3], 0
    %8 = vsyncpa [#allocation4], 0
    // Predicated region
    $region2: #{tpu_custom_call.1} parent=1 // pred_check
      _
    $region3: #{tpu_custom_call.1} parent=1 // pred_check_branch
      %10 = sbr.rel (0) target = $region5
    $region4: #{tpu_custom_call.1} parent=1 // pred_region
      %s12 = ssub.s32 256, 256
      %13 = vsyncadd [#allocation3], %s12
      %s14 = sshll.u32 [#allocation2], 4
      %s15 = int_to_ptr.vmem [resolvable:$true] %s14
      %20 = dma.hbm_to_vmem [thread:$0]  %s0, 256, %s15, [#allocation3], 128, 128, 8
    $region5: #{tpu_custom_call.1} parent=1 // pred_fallthru
      _
    // Predicated region
    $region6: #{tpu_custom_call.1} parent=1 // pred_check
      _
    $region7: #{tpu_custom_call.1} parent=1 // pred_check_branch
      %22 = sbr.rel (0) target = $region9
    $region8: #{tpu_custom_call.1} parent=1 // pred_region
      _
    $region9: #{tpu_custom_call.1} parent=1 // pred_fallthru
      _
    // Predicated region
    $region10: #{tpu_custom_call.1} parent=1 // pred_check
      _
    $region11: #{tpu_custom_call.1} parent=1 // pred_check_branch
      %24 = sbr.rel (0) target = $region13
    $region12: #{tpu_custom_call.1} parent=1 // pred_region
      %25 = dma.done [#allocation3], 256
    $region13: #{tpu_custom_call.1} parent=1 // pred_fallthru
      _
    %v26 = vld [vmem:[#allocation2] sm:$0xff]
    %v27 = vld [vmem:[#allocation2 + $0x8] sm:$0xff]
    %v28 = vld [vmem:[%s1] sm:$0x3]
    %v29 = vlaneseq
    %v30 = vshrl.u32 %v29, 7
    %v31 = vsub.s32 0, %v30
    %v32 = vrot.slane %v28, %v31
    %34 = vbcast.lane.b32.xlu0 %v32, 256
    %v35 = vpop.permute.xlu0 %34
    %v36 = vlaneseq
    %v37 = vshrl.u32 %v36, 7
    %v38 = vsub.s32 1, %v37
    %v39 = vrot.slane %v28, %v38
    %41 = vbcast.lane.b32.xlu0 %v39, 256
    %v42 = vpop.permute.xlu0 %41
    %v43 = vmul.f32 %v26, %v35
    %v44 = vmul.f32 %v27, %v42
    %vm45 = vcmask 261120
    %v47 = vsel %vm45, %v26, 0
    %v50 = vsel %vm45, %v43, 0
    %52 = vmatprep.subr.mxu0 0.0
    %53 = vmatpush1.xpose.msra.mxu0 %v50
    %54 = vmatprep.subr.mxu0 0.0
    %55 = vmatpush1.xpose.msra.mxu0 0.0
    %56 = vmatprep.subr.mxu0 0.0
    %57 = vmatpush1.xpose.msra.mxu0 0.0
    %58 = vmatprep.subr.mxu0 0.0
    %59 = vmatpush1.xpose.msra.mxu0 0.0
    %60 = vmatprep.subr.mxu0 0.0
    %61 = vmatpush1.xpose.msra.mxu0 0.0
    %62 = vmatprep.subr.mxu0 0.0
    %63 = vmatpush1.xpose.msra.mxu0 0.0
    %64 = vmatprep.subr.mxu0 0.0
    %65 = vmatpush1.xpose.msra.mxu0 0.0
    %66 = vmatprep.subr.mxu0 0.0
    %67 = vmatpush1.xpose.msra.mxu0 0.0
    %68 = vmatprep.subr.mxu0 0.0
    %69 = vmatpush1.xpose.msra.mxu0 0.0
    %70 = vmatprep.subr.mxu0 0.0
    %71 = vmatpush1.xpose.msra.mxu0 0.0
    %72 = vmatprep.subr.mxu0 0.0
    %73 = vmatpush1.xpose.msra.mxu0 0.0
    %74 = vmatprep.subr.mxu0 0.0
    %75 = vmatpush1.xpose.msra.mxu0 0.0
    %76 = vmatprep.subr.mxu0 0.0
    %77 = vmatpush1.xpose.msra.mxu0 0.0
    %78 = vmatprep.subr.mxu0 0.0
    %79 = vmatpush1.xpose.msra.mxu0 0.0
    %80 = vmatprep.subr.mxu0 0.0
    %81 = vmatpush1.xpose.msra.mxu0 0.0
    %82 = vmatprep.subr.mxu0 0.0
    %83 = vmatpush1.xpose.msra.mxu0 0.0
    %84 = vmatprep.subr.mxu0 0.0
    %85 = vmatpush1.xpose.msra.mxu0 0.0
    %86 = vmatprep.subr.mxu0 0.0
    %87 = vmatpush1.xpose.msra.mxu0 0.0
    %88 = vmatprep.subr.mxu0 0.0
    %89 = vmatpush1.xpose.msra.mxu0 0.0
    %90 = vmatprep.subr.mxu0 0.0
    %91 = vmatpush1.xpose.msra.mxu0 0.0
    %92 = vmatprep.subr.mxu0 0.0
    %93 = vmatpush1.xpose.msra.mxu0 0.0
    %94 = vmatprep.subr.mxu0 0.0
    %95 = vmatpush1.xpose.msra.mxu0 0.0
    %96 = vmatprep.subr.mxu0 0.0
    %97 = vmatpush1.xpose.msra.mxu0 0.0
    %98 = vmatprep.subr.mxu0 0.0
    %99 = vmatpush1.xpose.msra.mxu0 0.0
    %100 = vmatprep.subr.mxu0 0.0
    %101 = vmatpush1.xpose.msra.mxu0 0.0
    %102 = vmatprep.subr.mxu0 0.0
    %103 = vmatpush1.xpose.msra.mxu0 0.0
    %104 = vmatprep.subr.mxu0 0.0
    %105 = vmatpush1.xpose.msra.mxu0 0.0
    %106 = vmatprep.subr.mxu0 0.0
    %107 = vmatpush1.xpose.msra.mxu0 0.0
    %108 = vmatprep.subr.mxu0 0.0
    %109 = vmatpush1.xpose.msra.mxu0 0.0
    %110 = vmatprep.subr.mxu0 0.0
    %111 = vmatpush1.xpose.msra.mxu0 0.0
    %112 = vmatprep.subr.mxu0 0.0
    %113 = vmatpush1.xpose.msra.mxu0 0.0
    %114 = vmatprep.subr.mxu0 0.0
    %115 = vmatpush1.xpose.msra.mxu0 0.0
    %116 = vmatprep.mubr.f32.mxu0 0.0
    %117 = vmatmul.mubr.f32.gmra.mrb[0].mxu0 %v47
    %v118 = vpop.f32.mrb[0].mxu0
    %v119 = vadd.f32 0.0, %v118
    %v120 = vpop.f32.mrb[0].mxu0
    %121 = vdwg.mxu0
    %v123 = vsel %vm45, %v27, 0
    %v126 = vsel %vm45, %v44, 0
    %128 = vmatprep.subr.mxu0 0.0
    %129 = vmatpush1.xpose.msra.mxu0 %v126
    %130 = vmatprep.subr.mxu0 0.0
    %131 = vmatpush1.xpose.msra.mxu0 0.0
    %132 = vmatprep.subr.mxu0 0.0
    %133 = vmatpush1.xpose.msra.mxu0 0.0
    %134 = vmatprep.subr.mxu0 0.0
    %135 = vmatpush1.xpose.msra.mxu0 0.0
    %136 = vmatprep.subr.mxu0 0.0
    %137 = vmatpush1.xpose.msra.mxu0 0.0
    %138 = vmatprep.subr.mxu0 0.0
    %139 = vmatpush1.xpose.msra.mxu0 0.0
    %140 = vmatprep.subr.mxu0 0.0
    %141 = vmatpush1.xpose.msra.mxu0 0.0
    %142 = vmatprep.subr.mxu0 0.0
    %143 = vmatpush1.xpose.msra.mxu0 0.0
    %144 = vmatprep.subr.mxu0 0.0
    %145 = vmatpush1.xpose.msra.mxu0 0.0
    %146 = vmatprep.subr.mxu0 0.0
    %147 = vmatpush1.xpose.msra.mxu0 0.0
    %148 = vmatprep.subr.mxu0 0.0
    %149 = vmatpush1.xpose.msra.mxu0 0.0
    %150 = vmatprep.subr.mxu0 0.0
    %151 = vmatpush1.xpose.msra.mxu0 0.0
    %152 = vmatprep.subr.mxu0 0.0
    %153 = vmatpush1.xpose.msra.mxu0 0.0
    %154 = vmatprep.subr.mxu0 0.0
    %155 = vmatpush1.xpose.msra.mxu0 0.0
    %156 = vmatprep.subr.mxu0 0.0
    %157 = vmatpush1.xpose.msra.mxu0 0.0
    %158 = vmatprep.subr.mxu0 0.0
    %159 = vmatpush1.xpose.msra.mxu0 0.0
    %160 = vmatprep.subr.mxu0 0.0
    %161 = vmatpush1.xpose.msra.mxu0 0.0
    %162 = vmatprep.subr.mxu0 0.0
    %163 = vmatpush1.xpose.msra.mxu0 0.0
    %164 = vmatprep.subr.mxu0 0.0
    %165 = vmatpush1.xpose.msra.mxu0 0.0
    %166 = vmatprep.subr.mxu0 0.0
    %167 = vmatpush1.xpose.msra.mxu0 0.0
    %168 = vmatprep.subr.mxu0 0.0
    %169 = vmatpush1.xpose.msra.mxu0 0.0
    %170 = vmatprep.subr.mxu0 0.0
    %171 = vmatpush1.xpose.msra.mxu0 0.0
    %172 = vmatprep.subr.mxu0 0.0
    %173 = vmatpush1.xpose.msra.mxu0 0.0
    %174 = vmatprep.subr.mxu0 0.0
    %175 = vmatpush1.xpose.msra.mxu0 0.0
    %176 = vmatprep.subr.mxu0 0.0
    %177 = vmatpush1.xpose.msra.mxu0 0.0
    %178 = vmatprep.subr.mxu0 0.0
    %179 = vmatpush1.xpose.msra.mxu0 0.0
    %180 = vmatprep.subr.mxu0 0.0
    %181 = vmatpush1.xpose.msra.mxu0 0.0
    %182 = vmatprep.subr.mxu0 0.0
    %183 = vmatpush1.xpose.msra.mxu0 0.0
    %184 = vmatprep.subr.mxu0 0.0
    %185 = vmatpush1.xpose.msra.mxu0 0.0
    %186 = vmatprep.subr.mxu0 0.0
    %187 = vmatpush1.xpose.msra.mxu0 0.0
    %188 = vmatprep.subr.mxu0 0.0
    %189 = vmatpush1.xpose.msra.mxu0 0.0
    %190 = vmatprep.subr.mxu0 0.0
    %191 = vmatpush1.xpose.msra.mxu0 0.0
    %192 = vmatprep.mubr.f32.mxu0 0.0
    %193 = vmatmul.mubr.f32.gmra.mrb[0].mxu0 %v123
    %v194 = vpop.f32.mrb[0].mxu0
    %v195 = vadd.f32 0.0, %v194
    %v196 = vpop.f32.mrb[0].mxu0
    %197 = vdwg.mxu0
    %v198 = vmul.f32 %v119, %v35
    %v199 = vmul.f32 %v195, %v42
    %vm200 = vcmask 64512
    %v201 = vsel %vm200, %v198, -inf
    %v202 = vrot.slane %v201, 4
    %v203 = vmax.f32 %v201, %v202
    %v204 = vrot.slane %v203, 2
    %v205 = vmax.f32 %v203, %v204
    %v206 = vrot.slane %v205, 1
    %v207 = vmax.f32 %v205, %v206
    %v208 = vsel %vm200, %v199, -inf
    %v209 = vrot.slane %v208, 4
    %v210 = vmax.f32 %v208, %v209
    %v211 = vrot.slane %v210, 2
    %v212 = vmax.f32 %v210, %v211
    %v213 = vrot.slane %v212, 1
    %v214 = vmax.f32 %v212, %v213
    %v215 = vsub.f32 %v198, %v207
    %v216 = vsub.f32 %v199, %v214
    %v217 = vmul.f32 %v215, 1.442695
    %v218 = vpow.pop %v217
    %v219 = vmul.f32 %v216, 1.442695
    %v220 = vpow.pop %v219
    %v221 = vsel %vm200, %v218, 0.0
    %v222 = vrot.slane %v221, 4
    %v223 = vadd.f32 %v221, %v222
    %v224 = vrot.slane %v223, 2
    %v225 = vadd.f32 %v223, %v224
    %v226 = vrot.slane %v225, 1
    %v227 = vadd.f32 %v225, %v226
    %v228 = vsel %vm200, %v220, 0.0
    %v229 = vrot.slane %v228, 4
    %v230 = vadd.f32 %v228, %v229
    %v231 = vrot.slane %v230, 2
    %v232 = vadd.f32 %v230, %v231
    %v233 = vrot.slane %v232, 1
    %v234 = vadd.f32 %v232, %v233
    %v235 = vrcp.pop %v227
    %v236 = vmul.f32 1.0, %v235
    %v237 = vrcp.pop %v234
    %v238 = vmul.f32 1.0, %v237
    %v239 = vmul.f32 %v218, %v236
    %v240 = vmul.f32 %v220, %v238
    %v241 = vsel %vm200, %v239, 0.0
    %242 = vadd.xlane.f32.xlu0 %v241
    %v243 = vpop.xlane.xlu0 %242
    %v244 = vsel %vm200, %v240, 0.0
    %245 = vadd.xlane.f32.xlu0 %v244
    %v246 = vpop.xlane.xlu0 %245
    %v247 = vmul.f32 %v243, 0.125
    %v248 = vmul.f32 %v246, 0.125
    %v250 = vlaneseq
    %v251 = vshrl.u32 %v250, 7
    %v252 = vsub.s32 0, %v251
    %v253 = vrot.slane %v28, %v252
    %255 = vbcast.lane.b32.xlu0 %v253, 256
    %v256 = vpop.permute.xlu0 %255
    %v257 = vlaneseq
    %v258 = vshrl.u32 %v257, 7
    %v259 = vsub.s32 1, %v258
    %v260 = vrot.slane %v28, %v259
    %262 = vbcast.lane.b32.xlu0 %v260, 256
    %v263 = vpop.permute.xlu0 %262
    %v266 = vmul.f32 %v247, %v256
    %v267 = vmul.f32 %v248, %v263
    %269 = vset.pattern.permute.xlu0 0
    %270 = vperm.xlu0 %269, %v266
    %v271 = vpop.permute.xlu0 %270
    %v272 = vlaneseq
    %v273 = vand.u32 %v272, 127
    %v274 = vlaneseq
    %v275 = vshrl.u32 %v274, 7
    %v276 = vsub.s32 %v273, %v275
    %v277 = vrot.slane %v271, %v276
    %v278 = vsel %vm200, %v277, 0
    %280 = vmatprep.subr.mxu0 0.0
    %281 = vmatpush1.msra.mxu0 %v26
    %282 = vmatprep.subr.mxu0 0.0
    %283 = vmatpush1.msra.mxu0 0.0
    %284 = vmatprep.subr.mxu0 0.0
    %285 = vmatpush1.msra.mxu0 0.0
    %286 = vmatprep.subr.mxu0 0.0
    %287 = vmatpush1.msra.mxu0 0.0
    %288 = vmatprep.subr.mxu0 0.0
    %289 = vmatpush1.msra.mxu0 0.0
    %290 = vmatprep.subr.mxu0 0.0
    %291 = vmatpush1.msra.mxu0 0.0
    %292 = vmatprep.subr.mxu0 0.0
    %293 = vmatpush1.msra.mxu0 0.0
    %294 = vmatprep.subr.mxu0 0.0
    %295 = vmatpush1.msra.mxu0 0.0
    %296 = vmatprep.subr.mxu0 0.0
    %297 = vmatpush1.msra.mxu0 0.0
    %298 = vmatprep.subr.mxu0 0.0
    %299 = vmatpush1.msra.mxu0 0.0
    %300 = vmatprep.subr.mxu0 0.0
    %301 = vmatpush1.msra.mxu0 0.0
    %302 = vmatprep.subr.mxu0 0.0
    %303 = vmatpush1.msra.mxu0 0.0
    %304 = vmatprep.subr.mxu0 0.0
    %305 = vmatpush1.msra.mxu0 0.0
    %306 = vmatprep.subr.mxu0 0.0
    %307 = vmatpush1.msra.mxu0 0.0
    %308 = vmatprep.subr.mxu0 0.0
    %309 = vmatpush1.msra.mxu0 0.0
    %310 = vmatprep.subr.mxu0 0.0
    %311 = vmatpush1.msra.mxu0 0.0
    %312 = vmatprep.subr.mxu0 0.0
    %313 = vmatpush1.msra.mxu0 0.0
    %314 = vmatprep.subr.mxu0 0.0
    %315 = vmatpush1.msra.mxu0 0.0
    %316 = vmatprep.subr.mxu0 0.0
    %317 = vmatpush1.msra.mxu0 0.0
    %318 = vmatprep.subr.mxu0 0.0
    %319 = vmatpush1.msra.mxu0 0.0
    %320 = vmatprep.subr.mxu0 0.0
    %321 = vmatpush1.msra.mxu0 0.0
    %322 = vmatprep.subr.mxu0 0.0
    %323 = vmatpush1.msra.mxu0 0.0
    %324 = vmatprep.subr.mxu0 0.0
    %325 = vmatpush1.msra.mxu0 0.0
    %326 = vmatprep.subr.mxu0 0.0
    %327 = vmatpush1.msra.mxu0 0.0
    %328 = vmatprep.subr.mxu0 0.0
    %329 = vmatpush1.msra.mxu0 0.0
    %330 = vmatprep.subr.mxu0 0.0
    %331 = vmatpush1.msra.mxu0 0.0
    %332 = vmatprep.subr.mxu0 0.0
    %333 = vmatpush1.msra.mxu0 0.0
    %334 = vmatprep.subr.mxu0 0.0
    %335 = vmatpush1.msra.mxu0 0.0
    %336 = vmatprep.subr.mxu0 0.0
    %337 = vmatpush1.msra.mxu0 0.0
    %338 = vmatprep.subr.mxu0 0.0
    %339 = vmatpush1.msra.mxu0 0.0
    %340 = vmatprep.subr.mxu0 0.0
    %341 = vmatpush1.msra.mxu0 0.0
    %342 = vmatprep.subr.mxu0 0.0
    %343 = vmatpush1.msra.mxu0 0.0
    %344 = vmatprep.mubr.f32.mxu0 0.0
    %345 = vmatmul.mubr.f32.gmra.mrb[0].mxu0 %v278
    %v346 = vpop.f32.mrb[0].mxu0
    %v347 = vadd.f32 0.0, %v346
    %v348 = vpop.f32.mrb[0].mxu0
    %349 = vdwg.mxu0
    %351 = vset.pattern.permute.xlu0 0
    %352 = vperm.xlu0 %351, %v267
    %v353 = vpop.permute.xlu0 %352
    %v354 = vlaneseq
    %v355 = vshrl.u32 %v354, 7
    %v356 = vsub.s32 %v273, %v355
    %v357 = vrot.slane %v353, %v356
    %v358 = vsel %vm200, %v357, 0
    %360 = vmatprep.subr.mxu0 0.0
    %361 = vmatpush1.msra.mxu0 %v27
    %362 = vmatprep.subr.mxu0 0.0
    %363 = vmatpush1.msra.mxu0 0.0
    %364 = vmatprep.subr.mxu0 0.0
    %365 = vmatpush1.msra.mxu0 0.0
    %366 = vmatprep.subr.mxu0 0.0
    %367 = vmatpush1.msra.mxu0 0.0
    %368 = vmatprep.subr.mxu0 0.0
    %369 = vmatpush1.msra.mxu0 0.0
    %370 = vmatprep.subr.mxu0 0.0
    %371 = vmatpush1.msra.mxu0 0.0
    %372 = vmatprep.subr.mxu0 0.0
    %373 = vmatpush1.msra.mxu0 0.0
    %374 = vmatprep.subr.mxu0 0.0
    %375 = vmatpush1.msra.mxu0 0.0
    %376 = vmatprep.subr.mxu0 0.0
    %377 = vmatpush1.msra.mxu0 0.0
    %378 = vmatprep.subr.mxu0 0.0
    %379 = vmatpush1.msra.mxu0 0.0
    %380 = vmatprep.subr.mxu0 0.0
    %381 = vmatpush1.msra.mxu0 0.0
    %382 = vmatprep.subr.mxu0 0.0
    %383 = vmatpush1.msra.mxu0 0.0
    %384 = vmatprep.subr.mxu0 0.0
    %385 = vmatpush1.msra.mxu0 0.0
    %386 = vmatprep.subr.mxu0 0.0
    %387 = vmatpush1.msra.mxu0 0.0
    %388 = vmatprep.subr.mxu0 0.0
    %389 = vmatpush1.msra.mxu0 0.0
    %390 = vmatprep.subr.mxu0 0.0
    %391 = vmatpush1.msra.mxu0 0.0
    %392 = vmatprep.subr.mxu0 0.0
    %393 = vmatpush1.msra.mxu0 0.0
    %394 = vmatprep.subr.mxu0 0.0
    %395 = vmatpush1.msra.mxu0 0.0
    %396 = vmatprep.subr.mxu0 0.0
    %397 = vmatpush1.msra.mxu0 0.0
    %398 = vmatprep.subr.mxu0 0.0
    %399 = vmatpush1.msra.mxu0 0.0
    %400 = vmatprep.subr.mxu0 0.0
    %401 = vmatpush1.msra.mxu0 0.0
    %402 = vmatprep.subr.mxu0 0.0
    %403 = vmatpush1.msra.mxu0 0.0
    %404 = vmatprep.subr.mxu0 0.0
    %405 = vmatpush1.msra.mxu0 0.0
    %406 = vmatprep.subr.mxu0 0.0
    %407 = vmatpush1.msra.mxu0 0.0
    %408 = vmatprep.subr.mxu0 0.0
    %409 = vmatpush1.msra.mxu0 0.0
    %410 = vmatprep.subr.mxu0 0.0
    %411 = vmatpush1.msra.mxu0 0.0
    %412 = vmatprep.subr.mxu0 0.0
    %413 = vmatpush1.msra.mxu0 0.0
    %414 = vmatprep.subr.mxu0 0.0
    %415 = vmatpush1.msra.mxu0 0.0
    %416 = vmatprep.subr.mxu0 0.0
    %417 = vmatpush1.msra.mxu0 0.0
    %418 = vmatprep.subr.mxu0 0.0
    %419 = vmatpush1.msra.mxu0 0.0
    %420 = vmatprep.subr.mxu0 0.0
    %421 = vmatpush1.msra.mxu0 0.0
    %422 = vmatprep.subr.mxu0 0.0
    %423 = vmatpush1.msra.mxu0 0.0
    %424 = vmatprep.mubr.f32.mxu0 0.0
    %425 = vmatmul.mubr.f32.gmra.mrb[0].mxu0 %v358
    %v426 = vpop.f32.mrb[0].mxu0
    %v427 = vadd.f32 0.0, %v426
    %v428 = vpop.f32.mrb[0].mxu0
    %429 = vdwg.mxu0
    %v432 = vrot.slane %v427, 7
    %vm433 = vcmask 1041409
    %v434 = vsel %vm433, %v432, %v347
    %vm436 = vcmask 254976
    %437 = vst.msk [vmem:[#allocation5] sm:$0x3] %vm436, %v434
    // Predicated region
    $region14: #{tpu_custom_call.1} parent=1 // pred_check
      _
    $region15: #{tpu_custom_call.1} parent=1 // pred_check_branch
      %439 = sbr.rel (0) target = $region17
    $region16: #{tpu_custom_call.1} parent=1 // pred_region
      %s441 = ssub.s32 32, 32
      %442 = vsyncadd [#allocation4], %s441
      %s444 = sshll.u32 [#allocation5], 4
      %s445 = int_to_ptr.vmem [resolvable:$true] %s444
      %447 = dma.vmem_to_hbm [thread:$0]  %s445, 32, %s2, [#allocation4]
    $region17: #{tpu_custom_call.1} parent=1 // pred_fallthru
      _
    // Predicated region
    $region18: #{tpu_custom_call.1} parent=1 // pred_check
      _
    $region19: #{tpu_custom_call.1} parent=1 // pred_check_branch
      %449 = sbr.rel (0) target = $region21
    $region20: #{tpu_custom_call.1} parent=1 // pred_region
      %450 = dma.done [#allocation4], 32
    $region21: #{tpu_custom_call.1} parent=1 // pred_fallthru
      _
    %451 = vsyncpa [#allocation3], 1
    %452 = vsyncpa [#allocation4], 1

</llo_original>
